<compile_context>
chip_gen: v5e
topology: v5e:2x2
jax: 0.10.0
libtpu: 0.0.40
codegen_flags: <defaults>
</compile_context>

<pallas_src>
import jax
import jax.numpy as jnp
from jax.experimental import pallas as pl
from jax.experimental.pallas import tpu as pltpu


# ---------------------------------------------------------------------------
# Model configuration (small, consistent with the module's __init__)
# ---------------------------------------------------------------------------
BATCH              = 2
TITLE_TOKEN_LEN    = 8     # title_token_length
TITLE_EMB_SIZE     = 32    # title_embedding_size
TITLE_TOKEN_IDS    = 50    # vocab (49) + 1 placeholder (zero row)
AUTHOR_TOKEN_IDS   = 20
AUTHOR_EMB_SIZE    = 16
DOMAIN_TOKEN_IDS   = 20
DOMAIN_EMB_SIZE    = 16
TIME_FEATURES      = 5
HIDDEN_DIMS        = [256, 128, 64]          # ModelHyperparameters default
INPUT_FEATURE_LEN  = TITLE_EMB_SIZE + AUTHOR_EMB_SIZE + DOMAIN_EMB_SIZE + TIME_FEATURES  # 69

# Lane padding for the in-kernel one-hot / count matmuls (clean 128-wide K).
VOCAB_PAD = 128    # >= TITLE_TOKEN_IDS
ID_PAD    = 128    # >= AUTHOR_TOKEN_IDS / DOMAIN_TOKEN_IDS


# ---------------------------------------------------------------------------
# Pallas kernel: fused embedding "gather" (one-hot matmuls against pre-folded
# table @ W1 blocks) + 3x (Linear+ReLU) + 1-wide prediction head.
# ---------------------------------------------------------------------------
def hackernews_fused_kernel(title_ids_ref, dom_id_ref, auth_id_ref, time_ref,
                            m_title_ref, m_dom_ref, m_auth_ref, w1_time_ref, b1_ref,
                            w2_ref, b2_ref, w3_ref, b3_ref, wp_ref, bp_ref, out_ref):
    tm = title_ids_ref.shape[0]

    # ---- Title: token-count matrix (folds the mean over L tokens) ----------
    title_ids = title_ids_ref[...]                                      # (tm, L) int32
    vocab_iota = jax.lax.broadcasted_iota(jnp.int32, (tm, VOCAB_PAD), 1)
    counts = jnp.zeros((tm, VOCAB_PAD), jnp.float32)
    for j in range(TITLE_TOKEN_LEN):                                    # static unroll
        counts = counts + (title_ids[:, j:j + 1] == vocab_iota).astype(jnp.float32)

    # ---- Domain / author: one-hot rows --------------------------------------
    id_iota = jax.lax.broadcasted_iota(jnp.int32, (tm, ID_PAD), 1)
    dom_oh  = (dom_id_ref[...] == id_iota).astype(jnp.float32)          # (tm, ID_PAD)
    auth_oh = (auth_id_ref[...] == id_iota).astype(jnp.float32)         # (tm, ID_PAD)

    # ---- Layer 1: gather + Linear fused as bf16 MXU matmuls, f32 accum ------
    h = jnp.dot(counts.astype(jnp.bfloat16), m_title_ref[...],
                preferred_element_type=jnp.float32)
    h = h + jnp.dot(dom_oh.astype(jnp.bfloat16), m_dom_ref[...],
                    preferred_element_type=jnp.float32)
    h = h + jnp.dot(auth_oh.astype(jnp.bfloat16), m_auth_ref[...],
                    preferred_element_type=jnp.float32)
    # Time features (K=5): cheaper/safer on the VPU than a 5-wide matmul.
    t = time_ref[...]                                                    # (tm, 5) f32
    w1t = w1_time_ref[...]                                               # (5, H1) f32
    for j in range(TIME_FEATURES):                                       # static unroll
        h = h + t[:, j:j + 1] * w1t[j:j + 1, :]
    h = jnp.maximum(h + b1_ref[...], 0.0)

    # ---- Layer 2: (tm, 256) @ (256, 128) -----------------------------------
    h = jnp.dot(h.astype(jnp.bfloat16), w2_ref[...],
                preferred_element_type=jnp.float32)
    h = jnp.maximum(h + b2_ref[...], 0.0)

    # ---- Layer 3: (tm, 128) @ (128, 64) -------------------------------------
    h = jnp.dot(h.astype(jnp.bfloat16), w3_ref[...],
                preferred_element_type=jnp.float32)
    h = jnp.maximum(h + b3_ref[...], 0.0)

    # ---- Prediction head (1-wide): VPU multiply + lane reduce, tiny store ---
    out_ref[...] = jnp.sum(h * wp_ref[...], axis=-1, keepdims=True) + bp_ref[...]


# ---------------------------------------------------------------------------
# One-time weight preprocessing: fold embedding tables (and 1/L title mean)
# into the layer-1 weight blocks; cast MXU-side weights to bf16.
# ---------------------------------------------------------------------------
def prepare_kernel_params(params):
    Et, Ed, Ea = TITLE_EMB_SIZE, DOMAIN_EMB_SIZE, AUTHOR_EMB_SIZE
    w1 = params['w1']                                   # (69, 256) f32
    w1_title  = w1[0:Et]                                # (32, 256)
    w1_domain = w1[Et:Et + Ed]                          # (16, 256)
    w1_author = w1[Et + Ed:Et + Ed + Ea]                # (16, 256)
    w1_time   = w1[Et + Ed + Ea:]                       # (5, 256)

    # Fold (in f32): mean_title @ W1_title == counts @ (title_emb @ W1_title / L)
    m_title = (params['title_emb'] @ w1_title) * (1.0 / TITLE_TOKEN_LEN)   # (50, 256)
    m_dom   = params['domain_emb'] @ w1_domain                             # (20, 256)
    m_auth  = params['author_emb'] @ w1_author                             # (20, 256)

    def pad_rows_to(a, n):
        return jnp.concatenate([a, jnp.zeros((n - a.shape[0], a.shape[1]), a.dtype)], axis=0)

    return {
        'm_title': pad_rows_to(m_title, VOCAB_PAD).astype(jnp.bfloat16),   # (128, 256)
        'm_dom':   pad_rows_to(m_dom, ID_PAD).astype(jnp.bfloat16),        # (128, 256)
        'm_auth':  pad_rows_to(m_auth, ID_PAD).astype(jnp.bfloat16),       # (128, 256)
        'w1_time': w1_time,                                                # (5, 256) f32 (VPU path)
        'b1': params['b1'],                                                # (1, 256) f32
        'w2': params['w2'].astype(jnp.bfloat16), 'b2': params['b2'],
        'w3': params['w3'].astype(jnp.bfloat16), 'b3': params['b3'],
        'wp_row': params['wp'].T,                                          # (1, 64) f32
        'bp': params['bp'],                                                # (1, 1) f32
    }


# ---------------------------------------------------------------------------
# Forward pass. Only raw ids / time features cross the pallas_call boundary.
# ---------------------------------------------------------------------------
def hackernews_forward(kparams, features, *, tm=512):
    """Equivalent of HackerNewsNet.forward(features). Returns shape (B,).

    tm: max rows per batch tile. Small batches are padded only to a multiple of
    16 (bf16 sublane tile), not to a full tile. With tm=512, large batches give
    >=2 grid tiles (v7x second TensorCore participates) while staying well under
    VMEM limits on every generation; do NOT shrink tm to 128 on v5e.
    """
    title_ids = jnp.asarray(features['tokenized_titles'], jnp.int32)        # (B, L)
    B = title_ids.shape[0]
    dom_ids  = jnp.asarray(features['domain_id'], jnp.int32).reshape(B, 1)  # (B, 1)
    auth_ids = jnp.asarray(features['author_id'], jnp.int32).reshape(B, 1)  # (B, 1)
    time_f   = jnp.asarray(features['time'], jnp.float32).reshape(B, TIME_FEATURES)

    tm_eff = min(tm, ((B + 15) // 16) * 16)       # don't pad tiny batches to tm
    b_pad  = pl.cdiv(B, tm_eff) * tm_eff
    grid   = (b_pad // tm_eff,)

    def pad_rows(a):                               # zero-padded rows are inert & sliced off
        return jnp.pad(a, ((0, b_pad - B), (0, 0)))

    title_ids, dom_ids, auth_ids, time_f = map(pad_rows,
                                               (title_ids, dom_ids, auth_ids, time_f))

    def row_spec(cols):
        return pl.BlockSpec((tm_eff, cols), lambda i: (i, 0))

    def resident(arr):   # weights/biases stay VMEM-resident across batch tiles
        return pl.BlockSpec(arr.shape, lambda i: (0, 0))

    out = pl.pallas_call(
        hackernews_fused_kernel,
        out_shape=jax.ShapeDtypeStruct((b_pad, 1), jnp.float32),
        grid=grid,
        in_specs=[row_spec(TITLE_TOKEN_LEN), row_spec(1), row_spec(1), row_spec(TIME_FEATURES),
                  resident(kparams['m_title']), resident(kparams['m_dom']),
                  resident(kparams['m_auth']), resident(kparams['w1_time']),
                  resident(kparams['b1']),
                  resident(kparams['w2']), resident(kparams['b2']),
                  resident(kparams['w3']), resident(kparams['b3']),
                  resident(kparams['wp_row']), resident(kparams['bp'])],
        out_specs=pl.BlockSpec((tm_eff, 1), lambda i: (i, 0)),
        compiler_params=pltpu.CompilerParams(
            dimension_semantics=("parallel",)),
    )(title_ids, dom_ids, auth_ids, time_f,
      kparams['m_title'], kparams['m_dom'], kparams['m_auth'],
      kparams['w1_time'], kparams['b1'],
      kparams['w2'], kparams['b2'], kparams['w3'], kparams['b3'],
      kparams['wp_row'], kparams['bp'])

    # Drop batch padding, take the single prediction column, squeeze(dim=1).
    return out[:B, 0]


# ---------------------------------------------------------------------------
# Deterministic parameter initialization (mimics nn.Embedding / nn.Linear init)
# ---------------------------------------------------------------------------
def init_params(key):
    keys = jax.random.split(key, 16)

    def linear_init(kw, kb, fan_in, fan_out):
        bound = 1.0 / jnp.sqrt(jnp.float32(fan_in))
        w = jax.random.uniform(kw, (fan_in, fan_out), jnp.float32, -bound, bound)
        b = jax.random.uniform(kb, (1, fan_out), jnp.float32, -bound, bound)
        return w, b

    # title embedding table: vocab rows ~ N(0,1), last row = zeros (placeholder),
    # matching FeaturePreparer.initial_vocabulary_embeddings construction.
    title_emb = jax.random.normal(keys[0], (TITLE_TOKEN_IDS - 1, TITLE_EMB_SIZE), jnp.float32)
    title_emb = jnp.concatenate(
        [title_emb, jnp.zeros((1, TITLE_EMB_SIZE), jnp.float32)], axis=0)

    author_emb = jax.random.normal(keys[1], (AUTHOR_TOKEN_IDS, AUTHOR_EMB_SIZE), jnp.float32)
    domain_emb = jax.random.normal(keys[2], (DOMAIN_TOKEN_IDS, DOMAIN_EMB_SIZE), jnp.float32)

    w1, b1 = linear_init(keys[3], keys[4], INPUT_FEATURE_LEN, HIDDEN_DIMS[0])
    w2, b2 = linear_init(keys[5], keys[6], HIDDEN_DIMS[0], HIDDEN_DIMS[1])
    w3, b3 = linear_init(keys[7], keys[8], HIDDEN_DIMS[1], HIDDEN_DIMS[2])
    wp, bp = linear_init(keys[9], keys[10], HIDDEN_DIMS[2], 1)

    return {
        'title_emb': title_emb, 'author_emb': author_emb, 'domain_emb': domain_emb,
        'w1': w1, 'b1': b1, 'w2': w2, 'b2': b2, 'w3': w3, 'b3': b3,
        'wp': wp, 'bp': bp,
    }


if __name__ == "__main__":
    key = jax.random.PRNGKey(0)
    pkey, k_tok, k_auth, k_dom, k_time = jax.random.split(key, 5)

    params = init_params(pkey)
    kparams = prepare_kernel_params(params)

    # Deterministic example inputs, shaped as FeaturePreparer.prepare_batch_features
    # would produce them.
    tokenized_titles = jax.random.randint(
        k_tok, (BATCH, TITLE_TOKEN_LEN), 0, TITLE_TOKEN_IDS, dtype=jnp.int32)
    # include the placeholder token id to exercise the zero embedding row
    tokenized_titles = tokenized_titles.at[:, -1].set(TITLE_TOKEN_IDS - 1)
    author_id = jax.random.randint(k_auth, (BATCH,), 0, AUTHOR_TOKEN_IDS, dtype=jnp.int32)
    domain_id = jax.random.randint(k_dom, (BATCH,), 0, DOMAIN_TOKEN_IDS, dtype=jnp.int32)
    time_feats = jax.random.uniform(k_time, (BATCH, TIME_FEATURES), jnp.float32, -1.0, 1.0)

    features = {
        'tokenized_titles': tokenized_titles,
        'author_id': author_id,
        'domain_id': domain_id,
        'time': time_feats,
    }

    out = hackernews_forward(kparams, features)
    out = jax.block_until_ready(out)

    # Pure-f32 JAX reference with the exact PyTorch-module semantics
    # (embedding gathers, mean over title tokens, concat, 3x Linear+ReLU, head).
    title_mean = jnp.mean(params['title_emb'][tokenized_titles], axis=1)
    x_ref = jnp.concatenate(
        [title_mean, params['domain_emb'][domain_id],
         params['author_emb'][author_id], time_feats], axis=1)
    h_ref = jnp.maximum(x_ref @ params['w1'] + params['b1'], 0.0)
    h_ref = jnp.maximum(h_ref @ params['w2'] + params['b2'], 0.0)
    h_ref = jnp.maximum(h_ref @ params['w3'] + params['b3'], 0.0)
    ref = jnp.squeeze(h_ref @ params['wp'] + params['bp'], axis=1)

    assert out.shape == (BATCH,)
    # bf16 weights / MXU feeds in the kernel -> modest tolerance vs f32 reference.
    assert jnp.allclose(out, ref, atol=2e-2, rtol=2e-2), (out, ref)
    print("KERNEL_OK")
</pallas_src>

<mosaic_0001>
module attributes {stable_mosaic.version = 11 : i64} {
  func.func @hackernews_fused_kernel(%arg0: i32, %arg1: memref<16x8xi32, #tpu.memory_space<vmem>>, %arg2: memref<16x1xi32, #tpu.memory_space<vmem>>, %arg3: memref<16x1xi32, #tpu.memory_space<vmem>>, %arg4: memref<16x5xf32, #tpu.memory_space<vmem>>, %arg5: memref<128x256xbf16, #tpu.memory_space<vmem>>, %arg6: memref<128x256xbf16, #tpu.memory_space<vmem>>, %arg7: memref<128x256xbf16, #tpu.memory_space<vmem>>, %arg8: memref<5x256xf32, #tpu.memory_space<vmem>>, %arg9: memref<1x256xf32, #tpu.memory_space<vmem>>, %arg10: memref<256x128xbf16, #tpu.memory_space<vmem>>, %arg11: memref<1x128xf32, #tpu.memory_space<vmem>>, %arg12: memref<128x64xbf16, #tpu.memory_space<vmem>>, %arg13: memref<1x64xf32, #tpu.memory_space<vmem>>, %arg14: memref<1x64xf32, #tpu.memory_space<vmem>>, %arg15: memref<1x1xf32, #tpu.memory_space<vmem>>, %arg16: memref<16x1xf32, #tpu.memory_space<vmem>>) attributes {dimension_semantics = [#tpu.dimension_semantics<parallel>], iteration_bounds = array<i64: 1>, scalar_prefetch = 0 : i64, scratch_operands = 0 : i64, tpu.core_type = #tpu.core_type<tc>, window_params = [{transform_indices = @transform_0, window_bounds = array<i64: 16, 8>}, {transform_indices = @transform_1, window_bounds = array<i64: 16, 1>}, {transform_indices = @transform_2, window_bounds = array<i64: 16, 1>}, {transform_indices = @transform_3, window_bounds = array<i64: 16, 5>}, {pipeline_mode = #tpu.pipeline_mode<synchronous>, transform_indices = @transform_4, window_bounds = array<i64: 128, 256>}, {pipeline_mode = #tpu.pipeline_mode<synchronous>, transform_indices = @transform_5, window_bounds = array<i64: 128, 256>}, {pipeline_mode = #tpu.pipeline_mode<synchronous>, transform_indices = @transform_6, window_bounds = array<i64: 128, 256>}, {pipeline_mode = #tpu.pipeline_mode<synchronous>, transform_indices = @transform_7, window_bounds = array<i64: 5, 256>}, {pipeline_mode = #tpu.pipeline_mode<synchronous>, transform_indices = @transform_8, window_bounds = array<i64: 1, 256>}, {pipeline_mode = #tpu.pipeline_mode<synchronous>, transform_indices = @transform_9, window_bounds = array<i64: 256, 128>}, {pipeline_mode = #tpu.pipeline_mode<synchronous>, transform_indices = @transform_10, window_bounds = array<i64: 1, 128>}, {pipeline_mode = #tpu.pipeline_mode<synchronous>, transform_indices = @transform_11, window_bounds = array<i64: 128, 64>}, {pipeline_mode = #tpu.pipeline_mode<synchronous>, transform_indices = @transform_12, window_bounds = array<i64: 1, 64>}, {pipeline_mode = #tpu.pipeline_mode<synchronous>, transform_indices = @transform_13, window_bounds = array<i64: 1, 64>}, {pipeline_mode = #tpu.pipeline_mode<synchronous>, transform_indices = @transform_14, window_bounds = array<i64: 1, 1>}, {transform_indices = @transform_15, window_bounds = array<i64: 16, 1>}]} {
    %c0 = arith.constant 0 : index
    %c0_0 = arith.constant 0 : index
    %0 = vector.load %arg1[%c0, %c0_0] : memref<16x8xi32, #tpu.memory_space<vmem>>, vector<16x8xi32>
    %1 = tpu.iota {dimensions = array<i32: 1>} : vector<16x128xi32>
    %cst = arith.constant 0.000000e+00 : f32
    %2 = vector.broadcast %cst : f32 to vector<16x128xf32>
    %3 = vector.extract_strided_slice %0 {offsets = [0, 0], sizes = [16, 1], strides = [1, 1]} : vector<16x8xi32> to vector<16x1xi32>
    %4 = vector.broadcast %3 : vector<16x1xi32> to vector<16x128xi32>
    %5 = arith.cmpi eq, %4, %1 : vector<16x128xi32>
    %6 = arith.extui %5 : vector<16x128xi1> to vector<16x128xi32>
    %7 = arith.sitofp %6 : vector<16x128xi32> to vector<16x128xf32>
    %8 = arith.addf %2, %7 : vector<16x128xf32>
    %9 = vector.extract_strided_slice %0 {offsets = [0, 1], sizes = [16, 1], strides = [1, 1]} : vector<16x8xi32> to vector<16x1xi32>
    %10 = vector.broadcast %9 : vector<16x1xi32> to vector<16x128xi32>
    %11 = arith.cmpi eq, %10, %1 : vector<16x128xi32>
    %12 = arith.extui %11 : vector<16x128xi1> to vector<16x128xi32>
    %13 = arith.sitofp %12 : vector<16x128xi32> to vector<16x128xf32>
    %14 = arith.addf %8, %13 : vector<16x128xf32>
    %15 = vector.extract_strided_slice %0 {offsets = [0, 2], sizes = [16, 1], strides = [1, 1]} : vector<16x8xi32> to vector<16x1xi32>
    %16 = vector.broadcast %15 : vector<16x1xi32> to vector<16x128xi32>
    %17 = arith.cmpi eq, %16, %1 : vector<16x128xi32>
    %18 = arith.extui %17 : vector<16x128xi1> to vector<16x128xi32>
    %19 = arith.sitofp %18 : vector<16x128xi32> to vector<16x128xf32>
    %20 = arith.addf %14, %19 : vector<16x128xf32>
    %21 = vector.extract_strided_slice %0 {offsets = [0, 3], sizes = [16, 1], strides = [1, 1]} : vector<16x8xi32> to vector<16x1xi32>
    %22 = vector.broadcast %21 : vector<16x1xi32> to vector<16x128xi32>
    %23 = arith.cmpi eq, %22, %1 : vector<16x128xi32>
    %24 = arith.extui %23 : vector<16x128xi1> to vector<16x128xi32>
    %25 = arith.sitofp %24 : vector<16x128xi32> to vector<16x128xf32>
    %26 = arith.addf %20, %25 : vector<16x128xf32>
    %27 = vector.extract_strided_slice %0 {offsets = [0, 4], sizes = [16, 1], strides = [1, 1]} : vector<16x8xi32> to vector<16x1xi32>
    %28 = vector.broadcast %27 : vector<16x1xi32> to vector<16x128xi32>
    %29 = arith.cmpi eq, %28, %1 : vector<16x128xi32>
    %30 = arith.extui %29 : vector<16x128xi1> to vector<16x128xi32>
    %31 = arith.sitofp %30 : vector<16x128xi32> to vector<16x128xf32>
    %32 = arith.addf %26, %31 : vector<16x128xf32>
    %33 = vector.extract_strided_slice %0 {offsets = [0, 5], sizes = [16, 1], strides = [1, 1]} : vector<16x8xi32> to vector<16x1xi32>
    %34 = vector.broadcast %33 : vector<16x1xi32> to vector<16x128xi32>
    %35 = arith.cmpi eq, %34, %1 : vector<16x128xi32>
    %36 = arith.extui %35 : vector<16x128xi1> to vector<16x128xi32>
    %37 = arith.sitofp %36 : vector<16x128xi32> to vector<16x128xf32>
    %38 = arith.addf %32, %37 : vector<16x128xf32>
    %39 = vector.extract_strided_slice %0 {offsets = [0, 6], sizes = [16, 1], strides = [1, 1]} : vector<16x8xi32> to vector<16x1xi32>
    %40 = vector.broadcast %39 : vector<16x1xi32> to vector<16x128xi32>
    %41 = arith.cmpi eq, %40, %1 : vector<16x128xi32>
    %42 = arith.extui %41 : vector<16x128xi1> to vector<16x128xi32>
    %43 = arith.sitofp %42 : vector<16x128xi32> to vector<16x128xf32>
    %44 = arith.addf %38, %43 : vector<16x128xf32>
    %45 = vector.extract_strided_slice %0 {offsets = [0, 7], sizes = [16, 1], strides = [1, 1]} : vector<16x8xi32> to vector<16x1xi32>
    %46 = vector.broadcast %45 : vector<16x1xi32> to vector<16x128xi32>
    %47 = arith.cmpi eq, %46, %1 : vector<16x128xi32>
    %48 = arith.extui %47 : vector<16x128xi1> to vector<16x128xi32>
    %49 = arith.sitofp %48 : vector<16x128xi32> to vector<16x128xf32>
    %50 = arith.addf %44, %49 : vector<16x128xf32>
    %51 = tpu.iota {dimensions = array<i32: 1>} : vector<16x128xi32>
    %c0_1 = arith.constant 0 : index
    %c0_2 = arith.constant 0 : index
    %52 = vector.load %arg2[%c0_1, %c0_2] : memref<16x1xi32, #tpu.memory_space<vmem>>, vector<16x1xi32>
    %53 = vector.broadcast %52 : vector<16x1xi32> to vector<16x128xi32>
    %54 = arith.cmpi eq, %53, %51 : vector<16x128xi32>
    %55 = arith.extui %54 : vector<16x128xi1> to vector<16x128xi32>
    %56 = arith.sitofp %55 : vector<16x128xi32> to vector<16x128xf32>
    %c0_3 = arith.constant 0 : index
    %c0_4 = arith.constant 0 : index
    %57 = vector.load %arg3[%c0_3, %c0_4] : memref<16x1xi32, #tpu.memory_space<vmem>>, vector<16x1xi32>
    %58 = vector.broadcast %57 : vector<16x1xi32> to vector<16x128xi32>
    %59 = arith.cmpi eq, %58, %51 : vector<16x128xi32>
    %60 = arith.extui %59 : vector<16x128xi1> to vector<16x128xi32>
    %61 = arith.sitofp %60 : vector<16x128xi32> to vector<16x128xf32>
    %62 = arith.truncf %50 : vector<16x128xf32> to vector<16x128xbf16>
    %c0_5 = arith.constant 0 : index
    %c0_6 = arith.constant 0 : index
    %63 = vector.load %arg5[%c0_5, %c0_6] : memref<128x256xbf16, #tpu.memory_space<vmem>>, vector<128x256xbf16>
    %cst_7 = arith.constant dense<0.000000e+00> : vector<16x256xf32>
    %64 = tpu.matmul %62, %63, %cst_7 {dimension_numbers = #tpu.dot_dimension_numbers<[1], [0], [0], [1], [0, 0, 1, 1], [], []>} : vector<16x128xbf16>, vector<128x256xbf16>, vector<16x256xf32> -> vector<16x256xf32>
    %65 = arith.truncf %56 : vector<16x128xf32> to vector<16x128xbf16>
    %c0_8 = arith.constant 0 : index
    %c0_9 = arith.constant 0 : index
    %66 = vector.load %arg6[%c0_8, %c0_9] : memref<128x256xbf16, #tpu.memory_space<vmem>>, vector<128x256xbf16>
    %cst_10 = arith.constant dense<0.000000e+00> : vector<16x256xf32>
    %67 = tpu.matmul %65, %66, %cst_10 {dimension_numbers = #tpu.dot_dimension_numbers<[1], [0], [0], [1], [0, 0, 1, 1], [], []>} : vector<16x128xbf16>, vector<128x256xbf16>, vector<16x256xf32> -> vector<16x256xf32>
    %68 = arith.addf %64, %67 : vector<16x256xf32>
    %69 = arith.truncf %61 : vector<16x128xf32> to vector<16x128xbf16>
    %c0_11 = arith.constant 0 : index
    %c0_12 = arith.constant 0 : index
    %70 = vector.load %arg7[%c0_11, %c0_12] : memref<128x256xbf16, #tpu.memory_space<vmem>>, vector<128x256xbf16>
    %cst_13 = arith.constant dense<0.000000e+00> : vector<16x256xf32>
    %71 = tpu.matmul %69, %70, %cst_13 {dimension_numbers = #tpu.dot_dimension_numbers<[1], [0], [0], [1], [0, 0, 1, 1], [], []>} : vector<16x128xbf16>, vector<128x256xbf16>, vector<16x256xf32> -> vector<16x256xf32>
    %72 = arith.addf %68, %71 : vector<16x256xf32>
    %c0_14 = arith.constant 0 : index
    %c0_15 = arith.constant 0 : index
    %73 = vector.load %arg4[%c0_14, %c0_15] : memref<16x5xf32, #tpu.memory_space<vmem>>, vector<16x5xf32>
    %c0_16 = arith.constant 0 : index
    %c0_17 = arith.constant 0 : index
    %74 = vector.load %arg8[%c0_16, %c0_17] : memref<5x256xf32, #tpu.memory_space<vmem>>, vector<5x256xf32>
    %75 = vector.extract_strided_slice %73 {offsets = [0, 0], sizes = [16, 1], strides = [1, 1]} : vector<16x5xf32> to vector<16x1xf32>
    %76 = vector.extract_strided_slice %74 {offsets = [0, 0], sizes = [1, 256], strides = [1, 1]} : vector<5x256xf32> to vector<1x256xf32>
    %77 = vector.broadcast %75 : vector<16x1xf32> to vector<16x256xf32>
    %78 = vector.broadcast %76 : vector<1x256xf32> to vector<16x256xf32>
    %79 = arith.mulf %77, %78 : vector<16x256xf32>
    %80 = arith.addf %72, %79 : vector<16x256xf32>
    %81 = vector.extract_strided_slice %73 {offsets = [0, 1], sizes = [16, 1], strides = [1, 1]} : vector<16x5xf32> to vector<16x1xf32>
    %82 = vector.extract_strided_slice %74 {offsets = [1, 0], sizes = [1, 256], strides = [1, 1]} : vector<5x256xf32> to vector<1x256xf32>
    %83 = vector.broadcast %81 : vector<16x1xf32> to vector<16x256xf32>
    %84 = vector.broadcast %82 : vector<1x256xf32> to vector<16x256xf32>
    %85 = arith.mulf %83, %84 : vector<16x256xf32>
    %86 = arith.addf %80, %85 : vector<16x256xf32>
    %87 = vector.extract_strided_slice %73 {offsets = [0, 2], sizes = [16, 1], strides = [1, 1]} : vector<16x5xf32> to vector<16x1xf32>
    %88 = vector.extract_strided_slice %74 {offsets = [2, 0], sizes = [1, 256], strides = [1, 1]} : vector<5x256xf32> to vector<1x256xf32>
    %89 = vector.broadcast %87 : vector<16x1xf32> to vector<16x256xf32>
    %90 = vector.broadcast %88 : vector<1x256xf32> to vector<16x256xf32>
    %91 = arith.mulf %89, %90 : vector<16x256xf32>
    %92 = arith.addf %86, %91 : vector<16x256xf32>
    %93 = vector.extract_strided_slice %73 {offsets = [0, 3], sizes = [16, 1], strides = [1, 1]} : vector<16x5xf32> to vector<16x1xf32>
    %94 = vector.extract_strided_slice %74 {offsets = [3, 0], sizes = [1, 256], strides = [1, 1]} : vector<5x256xf32> to vector<1x256xf32>
    %95 = vector.broadcast %93 : vector<16x1xf32> to vector<16x256xf32>
    %96 = vector.broadcast %94 : vector<1x256xf32> to vector<16x256xf32>
    %97 = arith.mulf %95, %96 : vector<16x256xf32>
    %98 = arith.addf %92, %97 : vector<16x256xf32>
    %99 = vector.extract_strided_slice %73 {offsets = [0, 4], sizes = [16, 1], strides = [1, 1]} : vector<16x5xf32> to vector<16x1xf32>
    %100 = vector.extract_strided_slice %74 {offsets = [4, 0], sizes = [1, 256], strides = [1, 1]} : vector<5x256xf32> to vector<1x256xf32>
    %101 = vector.broadcast %99 : vector<16x1xf32> to vector<16x256xf32>
    %102 = vector.broadcast %100 : vector<1x256xf32> to vector<16x256xf32>
    %103 = arith.mulf %101, %102 : vector<16x256xf32>
    %104 = arith.addf %98, %103 : vector<16x256xf32>
    %c0_18 = arith.constant 0 : index
    %c0_19 = arith.constant 0 : index
    %105 = vector.load %arg9[%c0_18, %c0_19] : memref<1x256xf32, #tpu.memory_space<vmem>>, vector<1x256xf32>
    %106 = vector.broadcast %105 : vector<1x256xf32> to vector<16x256xf32>
    %107 = arith.addf %104, %106 : vector<16x256xf32>
    %cst_20 = arith.constant 0.000000e+00 : f32
    %108 = vector.broadcast %cst_20 : f32 to vector<16x256xf32>
    %109 = arith.maximumf %107, %108 : vector<16x256xf32>
    %110 = arith.truncf %109 : vector<16x256xf32> to vector<16x256xbf16>
    %c0_21 = arith.constant 0 : index
    %c0_22 = arith.constant 0 : index
    %111 = vector.load %arg10[%c0_21, %c0_22] : memref<256x128xbf16, #tpu.memory_space<vmem>>, vector<256x128xbf16>
    %cst_23 = arith.constant dense<0.000000e+00> : vector<16x128xf32>
    %112 = tpu.matmul %110, %111, %cst_23 {dimension_numbers = #tpu.dot_dimension_numbers<[1], [0], [0], [1], [0, 0, 1, 1], [], []>} : vector<16x256xbf16>, vector<256x128xbf16>, vector<16x128xf32> -> vector<16x128xf32>
    %c0_24 = arith.constant 0 : index
    %c0_25 = arith.constant 0 : index
    %113 = vector.load %arg11[%c0_24, %c0_25] : memref<1x128xf32, #tpu.memory_space<vmem>>, vector<1x128xf32>
    %114 = vector.broadcast %113 : vector<1x128xf32> to vector<16x128xf32>
    %115 = arith.addf %112, %114 : vector<16x128xf32>
    %cst_26 = arith.constant 0.000000e+00 : f32
    %116 = vector.broadcast %cst_26 : f32 to vector<16x128xf32>
    %117 = arith.maximumf %115, %116 : vector<16x128xf32>
    %118 = arith.truncf %117 : vector<16x128xf32> to vector<16x128xbf16>
    %c0_27 = arith.constant 0 : index
    %c0_28 = arith.constant 0 : index
    %119 = vector.load %arg12[%c0_27, %c0_28] : memref<128x64xbf16, #tpu.memory_space<vmem>>, vector<128x64xbf16>
    %cst_29 = arith.constant dense<0.000000e+00> : vector<16x64xf32>
    %120 = tpu.matmul %118, %119, %cst_29 {dimension_numbers = #tpu.dot_dimension_numbers<[1], [0], [0], [1], [0, 0, 1, 1], [], []>} : vector<16x128xbf16>, vector<128x64xbf16>, vector<16x64xf32> -> vector<16x64xf32>
    %c0_30 = arith.constant 0 : index
    %c0_31 = arith.constant 0 : index
    %121 = vector.load %arg13[%c0_30, %c0_31] : memref<1x64xf32, #tpu.memory_space<vmem>>, vector<1x64xf32>
    %122 = vector.broadcast %121 : vector<1x64xf32> to vector<16x64xf32>
    %123 = arith.addf %120, %122 : vector<16x64xf32>
    %cst_32 = arith.constant 0.000000e+00 : f32
    %124 = vector.broadcast %cst_32 : f32 to vector<16x64xf32>
    %125 = arith.maximumf %123, %124 : vector<16x64xf32>
    %c0_33 = arith.constant 0 : index
    %c0_34 = arith.constant 0 : index
    %126 = vector.load %arg14[%c0_33, %c0_34] : memref<1x64xf32, #tpu.memory_space<vmem>>, vector<1x64xf32>
    %127 = vector.broadcast %126 : vector<1x64xf32> to vector<16x64xf32>
    %128 = arith.mulf %125, %127 : vector<16x64xf32>
    %cst_35 = arith.constant dense<0.000000e+00> : vector<16xf32>
    %129 = vector.multi_reduction <add>, %128, %cst_35 [1] : vector<16x64xf32> to vector<16xf32>
    %130 = vector.shape_cast %129 : vector<16xf32> to vector<16x1xf32>
    %c0_36 = arith.constant 0 : index
    %c0_37 = arith.constant 0 : index
    %131 = vector.load %arg15[%c0_36, %c0_37] : memref<1x1xf32, #tpu.memory_space<vmem>>, vector<1x1xf32>
    %132 = vector.broadcast %131 : vector<1x1xf32> to vector<16x1xf32>
    %133 = arith.addf %130, %132 : vector<16x1xf32>
    %c0_38 = arith.constant 0 : index
    %c0_39 = arith.constant 0 : index
    %134 = vector.load %arg16[%c0_38, %c0_39] : memref<16x1xf32, #tpu.memory_space<vmem>>, vector<16x1xf32>
    tpu.vector_store %arg16[%c0_38, %c0_39], %133 {strides = array<i32>} : memref<16x1xf32, #tpu.memory_space<vmem>>, vector<16x1xf32>,
    return
  }
  func.func @transform_0(%arg0: i32) -> (i32, i32) {
    %c0_i32 = arith.constant 0 : i32
    %c0_i32_0 = arith.constant 0 : i32
    return %arg0, %c0_i32 : i32, i32
  }
  func.func @transform_1(%arg0: i32) -> (i32, i32) {
    %c0_i32 = arith.constant 0 : i32
    %c0_i32_0 = arith.constant 0 : i32
    return %arg0, %c0_i32 : i32, i32
  }
  func.func @transform_2(%arg0: i32) -> (i32, i32) {
    %c0_i32 = arith.constant 0 : i32
    %c0_i32_0 = arith.constant 0 : i32
    return %arg0, %c0_i32 : i32, i32
  }
  func.func @transform_3(%arg0: i32) -> (i32, i32) {
    %c0_i32 = arith.constant 0 : i32
    %c0_i32_0 = arith.constant 0 : i32
    return %arg0, %c0_i32 : i32, i32
  }
  func.func @transform_4(%arg0: i32) -> (i32, i32) {
    %c0_i32 = arith.constant 0 : i32
    %c0_i32_0 = arith.constant 0 : i32
    %c0_i32_1 = arith.constant 0 : i32
    return %c0_i32, %c0_i32_0 : i32, i32
  }
  func.func @transform_5(%arg0: i32) -> (i32, i32) {
    %c0_i32 = arith.constant 0 : i32
    %c0_i32_0 = arith.constant 0 : i32
    %c0_i32_1 = arith.constant 0 : i32
    return %c0_i32, %c0_i32_0 : i32, i32
  }
  func.func @transform_6(%arg0: i32) -> (i32, i32) {
    %c0_i32 = arith.constant 0 : i32
    %c0_i32_0 = arith.constant 0 : i32
    %c0_i32_1 = arith.constant 0 : i32
    return %c0_i32, %c0_i32_0 : i32, i32
  }
  func.func @transform_7(%arg0: i32) -> (i32, i32) {
    %c0_i32 = arith.constant 0 : i32
    %c0_i32_0 = arith.constant 0 : i32
    %c0_i32_1 = arith.constant 0 : i32
    return %c0_i32, %c0_i32_0 : i32, i32
  }
  func.func @transform_8(%arg0: i32) -> (i32, i32) {
    %c0_i32 = arith.constant 0 : i32
    %c0_i32_0 = arith.constant 0 : i32
    %c0_i32_1 = arith.constant 0 : i32
    return %c0_i32, %c0_i32_0 : i32, i32
  }
  func.func @transform_9(%arg0: i32) -> (i32, i32) {
    %c0_i32 = arith.constant 0 : i32
    %c0_i32_0 = arith.constant 0 : i32
    %c0_i32_1 = arith.constant 0 : i32
    return %c0_i32, %c0_i32_0 : i32, i32
  }
  func.func @transform_10(%arg0: i32) -> (i32, i32) {
    %c0_i32 = arith.constant 0 : i32
    %c0_i32_0 = arith.constant 0 : i32
    %c0_i32_1 = arith.constant 0 : i32
    return %c0_i32, %c0_i32_0 : i32, i32
  }
  func.func @transform_11(%arg0: i32) -> (i32, i32) {
    %c0_i32 = arith.constant 0 : i32
    %c0_i32_0 = arith.constant 0 : i32
    %c0_i32_1 = arith.constant 0 : i32
    return %c0_i32, %c0_i32_0 : i32, i32
  }
  func.func @transform_12(%arg0: i32) -> (i32, i32) {
    %c0_i32 = arith.constant 0 : i32
    %c0_i32_0 = arith.constant 0 : i32
    %c0_i32_1 = arith.constant 0 : i32
    return %c0_i32, %c0_i32_0 : i32, i32
  }
  func.func @transform_13(%arg0: i32) -> (i32, i32) {
    %c0_i32 = arith.constant 0 : i32
    %c0_i32_0 = arith.constant 0 : i32
    %c0_i32_1 = arith.constant 0 : i32
    return %c0_i32, %c0_i32_0 : i32, i32
  }
  func.func @transform_14(%arg0: i32) -> (i32, i32) {
    %c0_i32 = arith.constant 0 : i32
    %c0_i32_0 = arith.constant 0 : i32
    %c0_i32_1 = arith.constant 0 : i32
    return %c0_i32, %c0_i32_0 : i32, i32
  }
  func.func @transform_15(%arg0: i32) -> (i32, i32) {
    %c0_i32 = arith.constant 0 : i32
    %c0_i32_0 = arith.constant 0 : i32
    return %arg0, %c0_i32 : i32, i32
  }
}

</mosaic_0001>

<llo_original>
// kernel: tpu_custom_call.1
$region0: #{tpu_custom_call.1}
  #allocation0 [shape = 'u32[]', space=smem, size = 0x4, offset = 0x4, fixed_abs, tag = 'smem constant byte address 0x4 - core index']
  #allocation1 [shape = 'u32[72,128]{1,0:T(1,128)}', space=vmem, size = 0x9000, scoped, tag = 'internal scratch']
  #allocation2 [shape = 'f32[1,1]{1,0:T(1,128)S(1)}', space=vmem, size = 0x200, scoped, tag = 'scoped memory for tpu_custom_call.1']
  %s0 = inlined_call_operand.vmem [shape: s32[16,8], index: 0, kind: input, shape index: {}]
  %s1 = inlined_call_operand.vmem [shape: s32[16,1], index: 1, kind: input, shape index: {}]
  %s2 = inlined_call_operand.vmem [shape: s32[16,1], index: 2, kind: input, shape index: {}]
  %s3 = inlined_call_operand.vmem [shape: f32[16,5], index: 3, kind: input, shape index: {}]
  %s4 = inlined_call_operand.hbm [shape: bf16[128,256], index: 4, kind: input, shape index: {}]
  %s5 = inlined_call_operand.hbm [shape: bf16[128,256], index: 5, kind: input, shape index: {}]
  %s6 = inlined_call_operand.hbm [shape: bf16[128,256], index: 6, kind: input, shape index: {}]
  %s7 = inlined_call_operand.vmem [shape: f32[5,256], index: 7, kind: input, shape index: {}]
  %s8 = inlined_call_operand.vmem [shape: f32[1,256], index: 8, kind: input, shape index: {}]
  %s9 = inlined_call_operand.hbm [shape: bf16[256,128], index: 9, kind: input, shape index: {}]
  %s10 = inlined_call_operand.vmem [shape: f32[1,128], index: 10, kind: input, shape index: {}]
  %s11 = inlined_call_operand.vmem [shape: bf16[128,64], index: 11, kind: input, shape index: {}]
  %s12 = inlined_call_operand.vmem [shape: f32[1,64], index: 12, kind: input, shape index: {}]
  %s13 = inlined_call_operand.vmem [shape: f32[1,64], index: 13, kind: input, shape index: {}]
  %s14 = inlined_call_operand.<no memory space> [shape: f32[1,1], index: 14, kind: input, shape index: {}]
  %s15 = inlined_call_operand.vmem [shape: f32[16,1], index: 15, kind: output, shape index: {}]
  %s16 = sld [smem:[#allocation0]]
  $region86: #{tpu_custom_call.1} parent=0
    _
  %s18 = ssub.s32 1, %s16
  %s19 = scalar_select 0, %s18, %s16
  %v20 = vstv %s14
  %21 = vst [vmem:[#allocation2] sm:$0x1] %v20
  $region1: #{tpu_custom_call.1} parent=0
    #allocation3 [shape = 'u8[65536]{0}', space=vmem, size = 0x10000, scoped, tag = 'input window, operand 4, single buffered']
    #allocation4 [shape = 's32[1]{0}', space=sflag, size = 0x4, scoped, tag = 'scoped memory for tpu_custom_call.1']
    #allocation5 [shape = 'u8[65536]{0}', space=vmem, size = 0x10000, scoped, tag = 'input window, operand 5, single buffered']
    #allocation6 [shape = 's32[1]{0}', space=sflag, size = 0x4, scoped, tag = 'scoped memory for tpu_custom_call.1']
    #allocation7 [shape = 'u8[65536]{0}', space=vmem, size = 0x10000, scoped, tag = 'input window, operand 6, single buffered']
    #allocation8 [shape = 'u8[65536]{0}', space=vmem, size = 0x10000, scoped, tag = 'input window, operand 9, single buffered']
    #allocation9 [shape = 's32[1]{0}', space=sflag, size = 0x4, scoped, tag = 'scoped memory for tpu_custom_call.1']
    %22 = vsyncpa [#allocation4], 0
    %23 = vsyncpa [#allocation6], 0
    %24 = vsyncpa [#allocation9], 0
    // Predicated region
    $region2: #{tpu_custom_call.1} parent=1 // pred_check
      _
    $region3: #{tpu_custom_call.1} parent=1 // pred_check_branch
      %26 = sbr.rel (0) target = $region5
    $region4: #{tpu_custom_call.1} parent=1 // pred_region
      _
    $region5: #{tpu_custom_call.1} parent=1 // pred_fallthru
      _
    // Predicated region
    $region6: #{tpu_custom_call.1} parent=1 // pred_check
      _
    $region7: #{tpu_custom_call.1} parent=1 // pred_check_branch
      %28 = sbr.rel (0) target = $region9
    $region8: #{tpu_custom_call.1} parent=1 // pred_region
      _
    $region9: #{tpu_custom_call.1} parent=1 // pred_fallthru
      _
    // Predicated region
    $region10: #{tpu_custom_call.1} parent=1 // pred_check
      _
    $region11: #{tpu_custom_call.1} parent=1 // pred_check_branch
      %30 = sbr.rel (0) target = $region13
    $region12: #{tpu_custom_call.1} parent=1 // pred_region
      _
    $region13: #{tpu_custom_call.1} parent=1 // pred_fallthru
      _
    // Predicated region
    $region14: #{tpu_custom_call.1} parent=1 // pred_check
      _
    $region15: #{tpu_custom_call.1} parent=1 // pred_check_branch
      %32 = sbr.rel (0) target = $region17
    $region16: #{tpu_custom_call.1} parent=1 // pred_region
      _
    $region17: #{tpu_custom_call.1} parent=1 // pred_fallthru
      _
    // Predicated region
    $region18: #{tpu_custom_call.1} parent=1 // pred_check
      _
    $region19: #{tpu_custom_call.1} parent=1 // pred_check_branch
      %34 = sbr.rel (0) target = $region21
    $region20: #{tpu_custom_call.1} parent=1 // pred_region
      %36 = vsyncadd [#allocation4], 0
      %s37 = sshll.u32 %s4, 4
      %s38 = int_to_ptr.hbm [resolvable:$true] %s37
      %s39 = sshll.u32 [#allocation3], 4
      %s40 = int_to_ptr.vmem [resolvable:$true] %s39
      %45 = dma.hbm_to_vmem [thread:$0]  %s38, 2048, %s40, [#allocation4], 128, 128, 8
    $region21: #{tpu_custom_call.1} parent=1 // pred_fallthru
      _
    // Predicated region
    $region22: #{tpu_custom_call.1} parent=1 // pred_check
      _
    $region23: #{tpu_custom_call.1} parent=1 // pred_check_branch
      %47 = sbr.rel (0) target = $region25
    $region24: #{tpu_custom_call.1} parent=1 // pred_region
      %49 = vsyncadd [#allocation6], 0
      %s50 = sshll.u32 %s5, 4
      %s51 = int_to_ptr.hbm [resolvable:$true] %s50
      %s52 = sshll.u32 [#allocation5], 4
      %s53 = int_to_ptr.vmem [resolvable:$true] %s52
      %58 = dma.hbm_to_vmem [thread:$0]  %s51, 2048, %s53, [#allocation6], 128, 128, 8
    $region25: #{tpu_custom_call.1} parent=1 // pred_fallthru
      _
    // Predicated region
    $region26: #{tpu_custom_call.1} parent=1 // pred_check
      _
    $region27: #{tpu_custom_call.1} parent=1 // pred_check_branch
      %60 = sbr.rel (0) target = $region29
    $region28: #{tpu_custom_call.1} parent=1 // pred_region
      %62 = vsyncadd [#allocation6], 0
      %s63 = sshll.u32 %s6, 4
      %s64 = int_to_ptr.hbm [resolvable:$true] %s63
      %s65 = sshll.u32 [#allocation7], 4
      %s66 = int_to_ptr.vmem [resolvable:$true] %s65
      %71 = dma.hbm_to_vmem [thread:$0]  %s64, 2048, %s66, [#allocation6], 128, 128, 8
    $region29: #{tpu_custom_call.1} parent=1 // pred_fallthru
      _
    // Predicated region
    $region30: #{tpu_custom_call.1} parent=1 // pred_check
      _
    $region31: #{tpu_custom_call.1} parent=1 // pred_check_branch
      %73 = sbr.rel (0) target = $region33
    $region32: #{tpu_custom_call.1} parent=1 // pred_region
      _
    $region33: #{tpu_custom_call.1} parent=1 // pred_fallthru
      _
    // Predicated region
    $region34: #{tpu_custom_call.1} parent=1 // pred_check
      _
    $region35: #{tpu_custom_call.1} parent=1 // pred_check_branch
      %75 = sbr.rel (0) target = $region37
    $region36: #{tpu_custom_call.1} parent=1 // pred_region
      _
    $region37: #{tpu_custom_call.1} parent=1 // pred_fallthru
      _
    // Predicated region
    $region38: #{tpu_custom_call.1} parent=1 // pred_check
      _
    $region39: #{tpu_custom_call.1} parent=1 // pred_check_branch
      %77 = sbr.rel (0) target = $region41
    $region40: #{tpu_custom_call.1} parent=1 // pred_region
      %79 = vsyncadd [#allocation9], 0
      %s80 = sshll.u32 %s9, 4
      %s81 = int_to_ptr.hbm [resolvable:$true] %s80
      %s82 = sshll.u32 [#allocation8], 4
      %s83 = int_to_ptr.vmem [resolvable:$true] %s82
      %88 = dma.hbm_to_vmem [thread:$0]  %s81, 2048, %s83, [#allocation9], 64, 64, 4
    $region41: #{tpu_custom_call.1} parent=1 // pred_fallthru
      _
    // Predicated region
    $region42: #{tpu_custom_call.1} parent=1 // pred_check
      _
    $region43: #{tpu_custom_call.1} parent=1 // pred_check_branch
      %90 = sbr.rel (0) target = $region45
    $region44: #{tpu_custom_call.1} parent=1 // pred_region
      _
    $region45: #{tpu_custom_call.1} parent=1 // pred_fallthru
      _
    // Predicated region
    $region46: #{tpu_custom_call.1} parent=1 // pred_check
      _
    $region47: #{tpu_custom_call.1} parent=1 // pred_check_branch
      %92 = sbr.rel (0) target = $region49
    $region48: #{tpu_custom_call.1} parent=1 // pred_region
      _
    $region49: #{tpu_custom_call.1} parent=1 // pred_fallthru
      _
    // Predicated region
    $region50: #{tpu_custom_call.1} parent=1 // pred_check
      _
    $region51: #{tpu_custom_call.1} parent=1 // pred_check_branch
      %94 = sbr.rel (0) target = $region53
    $region52: #{tpu_custom_call.1} parent=1 // pred_region
      _
    $region53: #{tpu_custom_call.1} parent=1 // pred_fallthru
      _
    // Predicated region
    $region54: #{tpu_custom_call.1} parent=1 // pred_check
      _
    $region55: #{tpu_custom_call.1} parent=1 // pred_check_branch
      %96 = sbr.rel (0) target = $region57
    $region56: #{tpu_custom_call.1} parent=1 // pred_region
      _
    $region57: #{tpu_custom_call.1} parent=1 // pred_fallthru
      _
    // Predicated region
    $region58: #{tpu_custom_call.1} parent=1 // pred_check
      _
    $region59: #{tpu_custom_call.1} parent=1 // pred_check_branch
      %98 = sbr.rel (0) target = $region61
    $region60: #{tpu_custom_call.1} parent=1 // pred_region
      _
    $region61: #{tpu_custom_call.1} parent=1 // pred_fallthru
      _
    // Predicated region
    $region62: #{tpu_custom_call.1} parent=1 // pred_check
      _
    $region63: #{tpu_custom_call.1} parent=1 // pred_check_branch
      %100 = sbr.rel (0) target = $region65
    $region64: #{tpu_custom_call.1} parent=1 // pred_region
      %102 = dma.done [#allocation4], 2048
    $region65: #{tpu_custom_call.1} parent=1 // pred_fallthru
      _
    // Predicated region
    $region66: #{tpu_custom_call.1} parent=1 // pred_check
      _
    $region67: #{tpu_custom_call.1} parent=1 // pred_check_branch
      %104 = sbr.rel (0) target = $region69
    $region68: #{tpu_custom_call.1} parent=1 // pred_region
      %106 = dma.done [#allocation6], 2048
    $region69: #{tpu_custom_call.1} parent=1 // pred_fallthru
      _
    // Predicated region
    $region70: #{tpu_custom_call.1} parent=1 // pred_check
      _
    $region71: #{tpu_custom_call.1} parent=1 // pred_check_branch
      %108 = sbr.rel (0) target = $region73
    $region72: #{tpu_custom_call.1} parent=1 // pred_region
      %110 = dma.done [#allocation6], 2048
    $region73: #{tpu_custom_call.1} parent=1 // pred_fallthru
      _
    // Predicated region
    $region74: #{tpu_custom_call.1} parent=1 // pred_check
      _
    $region75: #{tpu_custom_call.1} parent=1 // pred_check_branch
      %112 = sbr.rel (0) target = $region77
    $region76: #{tpu_custom_call.1} parent=1 // pred_region
      %114 = dma.done [#allocation9], 2048
    $region77: #{tpu_custom_call.1} parent=1 // pred_fallthru
      _
    %v115 = vld [vmem:[%s0] sm:$0xff]
    %v116 = vld [vmem:[%s0 + $0x8] sm:$0xff]
    %v117 = vlaneseq
    %v118 = vand.u32 %v117, 127
    %119 = vset.pattern.permute.xlu0 0
    %120 = vperm.xlu0 %119, %v115
    %v121 = vpop.permute.xlu0 %120
    %122 = vset.pattern.permute.xlu0 0
    %123 = vperm.xlu0 %122, %v116
    %v124 = vpop.permute.xlu0 %123
    %vm125 = vcmp.eq.s32.totalorder %v121, %v118
    %vm126 = vcmp.eq.s32.totalorder %v124, %v118
    %v127 = vsel %vm125, 1, 0
    %v128 = vsel %vm126, 1, 0
    %v129 = vcvt.s32.f32 %v127
    %v130 = vcvt.s32.f32 %v128
    %v131 = vadd.f32 %v129, 0.0
    %v132 = vadd.f32 %v130, 0.0
    %133 = vset.pattern.permute.xlu0 1
    %134 = vperm.xlu0 %133, %v115
    %v135 = vpop.permute.xlu0 %134
    %136 = vset.pattern.permute.xlu0 1
    %137 = vperm.xlu0 %136, %v116
    %v138 = vpop.permute.xlu0 %137
    %vm139 = vcmp.eq.s32.totalorder %v135, %v118
    %vm140 = vcmp.eq.s32.totalorder %v138, %v118
    %v141 = vsel %vm139, 1, 0
    %v142 = vsel %vm140, 1, 0
    %v143 = vcvt.s32.f32 %v141
    %v144 = vcvt.s32.f32 %v142
    %v145 = vadd.f32 %v131, %v143
    %v146 = vadd.f32 %v132, %v144
    %147 = vset.pattern.permute.xlu0 2
    %148 = vperm.xlu0 %147, %v115
    %v149 = vpop.permute.xlu0 %148
    %150 = vset.pattern.permute.xlu0 2
    %151 = vperm.xlu0 %150, %v116
    %v152 = vpop.permute.xlu0 %151
    %vm153 = vcmp.eq.s32.totalorder %v149, %v118
    %vm154 = vcmp.eq.s32.totalorder %v152, %v118
    %v155 = vsel %vm153, 1, 0
    %v156 = vsel %vm154, 1, 0
    %v157 = vcvt.s32.f32 %v155
    %v158 = vcvt.s32.f32 %v156
    %v159 = vadd.f32 %v145, %v157
    %v160 = vadd.f32 %v146, %v158
    %161 = vset.pattern.permute.xlu0 3
    %162 = vperm.xlu0 %161, %v115
    %v163 = vpop.permute.xlu0 %162
    %164 = vset.pattern.permute.xlu0 3
    %165 = vperm.xlu0 %164, %v116
    %v166 = vpop.permute.xlu0 %165
    %vm167 = vcmp.eq.s32.totalorder %v163, %v118
    %vm168 = vcmp.eq.s32.totalorder %v166, %v118
    %v169 = vsel %vm167, 1, 0
    %v170 = vsel %vm168, 1, 0
    %v171 = vcvt.s32.f32 %v169
    %v172 = vcvt.s32.f32 %v170
    %v173 = vadd.f32 %v159, %v171
    %v174 = vadd.f32 %v160, %v172
    %175 = vset.pattern.permute.xlu0 4
    %176 = vperm.xlu0 %175, %v115
    %v177 = vpop.permute.xlu0 %176
    %178 = vset.pattern.permute.xlu0 4
    %179 = vperm.xlu0 %178, %v116
    %v180 = vpop.permute.xlu0 %179
    %vm181 = vcmp.eq.s32.totalorder %v177, %v118
    %vm182 = vcmp.eq.s32.totalorder %v180, %v118
    %v183 = vsel %vm181, 1, 0
    %v184 = vsel %vm182, 1, 0
    %v185 = vcvt.s32.f32 %v183
    %v186 = vcvt.s32.f32 %v184
    %v187 = vadd.f32 %v173, %v185
    %v188 = vadd.f32 %v174, %v186
    %189 = vset.pattern.permute.xlu0 5
    %190 = vperm.xlu0 %189, %v115
    %v191 = vpop.permute.xlu0 %190
    %192 = vset.pattern.permute.xlu0 5
    %193 = vperm.xlu0 %192, %v116
    %v194 = vpop.permute.xlu0 %193
    %vm195 = vcmp.eq.s32.totalorder %v191, %v118
    %vm196 = vcmp.eq.s32.totalorder %v194, %v118
    %v197 = vsel %vm195, 1, 0
    %v198 = vsel %vm196, 1, 0
    %v199 = vcvt.s32.f32 %v197
    %v200 = vcvt.s32.f32 %v198
    %v201 = vadd.f32 %v187, %v199
    %v202 = vadd.f32 %v188, %v200
    %203 = vset.pattern.permute.xlu0 6
    %204 = vperm.xlu0 %203, %v115
    %v205 = vpop.permute.xlu0 %204
    %206 = vset.pattern.permute.xlu0 6
    %207 = vperm.xlu0 %206, %v116
    %v208 = vpop.permute.xlu0 %207
    %vm209 = vcmp.eq.s32.totalorder %v205, %v118
    %vm210 = vcmp.eq.s32.totalorder %v208, %v118
    %v211 = vsel %vm209, 1, 0
    %v212 = vsel %vm210, 1, 0
    %v213 = vcvt.s32.f32 %v211
    %v214 = vcvt.s32.f32 %v212
    %v215 = vadd.f32 %v201, %v213
    %v216 = vadd.f32 %v202, %v214
    %217 = vset.pattern.permute.xlu0 7
    %218 = vperm.xlu0 %217, %v115
    %v219 = vpop.permute.xlu0 %218
    %220 = vset.pattern.permute.xlu0 7
    %221 = vperm.xlu0 %220, %v116
    %v222 = vpop.permute.xlu0 %221
    %vm223 = vcmp.eq.s32.totalorder %v219, %v118
    %vm224 = vcmp.eq.s32.totalorder %v222, %v118
    %v225 = vsel %vm223, 1, 0
    %v226 = vsel %vm224, 1, 0
    %v227 = vcvt.s32.f32 %v225
    %v228 = vcvt.s32.f32 %v226
    %v229 = vadd.f32 %v215, %v227
    %v230 = vadd.f32 %v216, %v228
    %v231 = vld [vmem:[%s1] sm:$0xff]
    %v232 = vld [vmem:[%s1 + $0x8] sm:$0xff]
    %233 = vset.pattern.permute.xlu0 0
    %234 = vperm.xlu0 %233, %v231
    %v235 = vpop.permute.xlu0 %234
    %236 = vset.pattern.permute.xlu0 0
    %237 = vperm.xlu0 %236, %v232
    %v238 = vpop.permute.xlu0 %237
    %vm239 = vcmp.eq.s32.totalorder %v235, %v118
    %vm240 = vcmp.eq.s32.totalorder %v238, %v118
    %v241 = vld [vmem:[%s2] sm:$0xff]
    %v242 = vld [vmem:[%s2 + $0x8] sm:$0xff]
    %243 = vset.pattern.permute.xlu0 0
    %244 = vperm.xlu0 %243, %v241
    %v245 = vpop.permute.xlu0 %244
    %246 = vset.pattern.permute.xlu0 0
    %247 = vperm.xlu0 %246, %v242
    %v248 = vpop.permute.xlu0 %247
    %vm249 = vcmp.eq.s32.totalorder %v245, %v118
    %vm250 = vcmp.eq.s32.totalorder %v248, %v118
    %v251 = vpack.c.bf16 %v230, %v229
    %v252 = vld [vmem:[#allocation3] sm:$0xff]
    %v253 = vld [vmem:[#allocation3 + $0x8] sm:$0xff]
    %v254 = vld [vmem:[#allocation3 + $0x10] sm:$0xff]
    %v255 = vld [vmem:[#allocation3 + $0x18] sm:$0xff]
    %v256 = vld [vmem:[#allocation3 + $0x20] sm:$0xff]
    %v257 = vld [vmem:[#allocation3 + $0x28] sm:$0xff]
    %v258 = vld [vmem:[#allocation3 + $0x30] sm:$0xff]
    %v259 = vld [vmem:[#allocation3 + $0x38] sm:$0xff]
    %v260 = vld [vmem:[#allocation3 + $0x40] sm:$0xff]
    %v261 = vld [vmem:[#allocation3 + $0x48] sm:$0xff]
    %v262 = vld [vmem:[#allocation3 + $0x50] sm:$0xff]
    %v263 = vld [vmem:[#allocation3 + $0x58] sm:$0xff]
    %v264 = vld [vmem:[#allocation3 + $0x60] sm:$0xff]
    %v265 = vld [vmem:[#allocation3 + $0x68] sm:$0xff]
    %v266 = vld [vmem:[#allocation3 + $0x70] sm:$0xff]
    %v267 = vld [vmem:[#allocation3 + $0x78] sm:$0xff]
    %v268 = vsel %vm239, 1, 0
    %v269 = vsel %vm240, 1, 0
    %v270 = vcvt.s32.f32 %v268
    %v271 = vcvt.s32.f32 %v269
    %v272 = vpack.c.bf16 %v271, %v270
    %v273 = vld [vmem:[#allocation5] sm:$0xff]
    %v274 = vld [vmem:[#allocation5 + $0x8] sm:$0xff]
    %v275 = vld [vmem:[#allocation5 + $0x10] sm:$0xff]
    %v276 = vld [vmem:[#allocation5 + $0x18] sm:$0xff]
    %v277 = vld [vmem:[#allocation5 + $0x20] sm:$0xff]
    %v278 = vld [vmem:[#allocation5 + $0x28] sm:$0xff]
    %v279 = vld [vmem:[#allocation5 + $0x30] sm:$0xff]
    %v280 = vld [vmem:[#allocation5 + $0x38] sm:$0xff]
    %v281 = vld [vmem:[#allocation5 + $0x40] sm:$0xff]
    %v282 = vld [vmem:[#allocation5 + $0x48] sm:$0xff]
    %v283 = vld [vmem:[#allocation5 + $0x50] sm:$0xff]
    %v284 = vld [vmem:[#allocation5 + $0x58] sm:$0xff]
    %v285 = vld [vmem:[#allocation5 + $0x60] sm:$0xff]
    %v286 = vld [vmem:[#allocation5 + $0x68] sm:$0xff]
    %v287 = vld [vmem:[#allocation5 + $0x70] sm:$0xff]
    %v288 = vld [vmem:[#allocation5 + $0x78] sm:$0xff]
    %v305 = vunpack.c.l.b16 %v273
    %v306 = vunpack.c.h.b16 %v273
    %v307 = vunpack.c.l.b16 %v274
    %v308 = vunpack.c.h.b16 %v274
    %v309 = vunpack.c.l.b16 %v275
    %v310 = vunpack.c.h.b16 %v275
    %v311 = vunpack.c.l.b16 %v276
    %v312 = vunpack.c.h.b16 %v276
    %v313 = vunpack.c.l.b16 %v277
    %v314 = vunpack.c.h.b16 %v277
    %v315 = vunpack.c.l.b16 %v278
    %v316 = vunpack.c.h.b16 %v278
    %v317 = vunpack.c.l.b16 %v279
    %v318 = vunpack.c.h.b16 %v279
    %v319 = vunpack.c.l.b16 %v280
    %v320 = vunpack.c.h.b16 %v280
    %v321 = vunpack.c.l.b16 %v281
    %v322 = vunpack.c.h.b16 %v281
    %v323 = vunpack.c.l.b16 %v282
    %v324 = vunpack.c.h.b16 %v282
    %v325 = vunpack.c.l.b16 %v283
    %v326 = vunpack.c.h.b16 %v283
    %v327 = vunpack.c.l.b16 %v284
    %v328 = vunpack.c.h.b16 %v284
    %v329 = vunpack.c.l.b16 %v285
    %v330 = vunpack.c.h.b16 %v285
    %v331 = vunpack.c.l.b16 %v286
    %v332 = vunpack.c.h.b16 %v286
    %v333 = vunpack.c.l.b16 %v287
    %v334 = vunpack.c.h.b16 %v287
    %v335 = vunpack.c.l.b16 %v288
    %v336 = vunpack.c.h.b16 %v288
    %v337 = vpack.c.b16 %v307, %v305
    %v338 = vpack.c.b16 %v308, %v306
    %v339 = vpack.c.b16 %v311, %v309
    %v340 = vpack.c.b16 %v312, %v310
    %v341 = vpack.c.b16 %v315, %v313
    %v342 = vpack.c.b16 %v316, %v314
    %v343 = vpack.c.b16 %v319, %v317
    %v344 = vpack.c.b16 %v320, %v318
    %v345 = vpack.c.b16 %v323, %v321
    %v346 = vpack.c.b16 %v324, %v322
    %v347 = vpack.c.b16 %v327, %v325
    %v348 = vpack.c.b16 %v328, %v326
    %v349 = vpack.c.b16 %v331, %v329
    %v350 = vpack.c.b16 %v332, %v330
    %v351 = vpack.c.b16 %v335, %v333
    %v352 = vpack.c.b16 %v336, %v334
    %369 = vmatpush.bf16.msra.mxu0 %v351
    %370 = vmatpush.bf16.msra.mxu0 %v349
    %371 = vmatpush.bf16.msra.mxu0 %v347
    %372 = vmatpush.bf16.msra.mxu0 %v345
    %373 = vmatpush.bf16.msra.mxu0 %v343
    %374 = vmatpush.bf16.msra.mxu0 %v341
    %375 = vmatpush.bf16.msra.mxu0 %v339
    %376 = vmatpush.bf16.msra.mxu0 %v337
    %377 = vmatmul.bf16.gmra.mxu0 %v272
    %v378 = vpop.f32.mrf.mxu0
    %v379 = vadd.f32 0.0, %v378
    %v380 = vpop.f32.mrf.mxu0
    %v381 = vadd.f32 0.0, %v380
    %382 = vdwg.mxu0
    %383 = vmatpush.bf16.msra.mxu0 %v352
    %384 = vmatpush.bf16.msra.mxu0 %v350
    %385 = vmatpush.bf16.msra.mxu0 %v348
    %386 = vmatpush.bf16.msra.mxu0 %v346
    %387 = vmatpush.bf16.msra.mxu0 %v344
    %388 = vmatpush.bf16.msra.mxu0 %v342
    %389 = vmatpush.bf16.msra.mxu0 %v340
    %390 = vmatpush.bf16.msra.mxu0 %v338
    %391 = vmatmul.bf16.gmra.mxu0 %v272
    %v392 = vpop.f32.mrf.mxu0
    %v393 = vadd.f32 0.0, %v392
    %v394 = vpop.f32.mrf.mxu0
    %v395 = vadd.f32 0.0, %v394
    %396 = vdwg.mxu0
    %v413 = vunpack.c.l.b16 %v252
    %v414 = vunpack.c.h.b16 %v252
    %v415 = vunpack.c.l.b16 %v253
    %v416 = vunpack.c.h.b16 %v253
    %v417 = vunpack.c.l.b16 %v254
    %v418 = vunpack.c.h.b16 %v254
    %v419 = vunpack.c.l.b16 %v255
    %v420 = vunpack.c.h.b16 %v255
    %v421 = vunpack.c.l.b16 %v256
    %v422 = vunpack.c.h.b16 %v256
    %v423 = vunpack.c.l.b16 %v257
    %v424 = vunpack.c.h.b16 %v257
    %v425 = vunpack.c.l.b16 %v258
    %v426 = vunpack.c.h.b16 %v258
    %v427 = vunpack.c.l.b16 %v259
    %v428 = vunpack.c.h.b16 %v259
    %v429 = vunpack.c.l.b16 %v260
    %v430 = vunpack.c.h.b16 %v260
    %v431 = vunpack.c.l.b16 %v261
    %v432 = vunpack.c.h.b16 %v261
    %v433 = vunpack.c.l.b16 %v262
    %v434 = vunpack.c.h.b16 %v262
    %v435 = vunpack.c.l.b16 %v263
    %v436 = vunpack.c.h.b16 %v263
    %v437 = vunpack.c.l.b16 %v264
    %v438 = vunpack.c.h.b16 %v264
    %v439 = vunpack.c.l.b16 %v265
    %v440 = vunpack.c.h.b16 %v265
    %v441 = vunpack.c.l.b16 %v266
    %v442 = vunpack.c.h.b16 %v266
    %v443 = vunpack.c.l.b16 %v267
    %v444 = vunpack.c.h.b16 %v267
    %v445 = vpack.c.b16 %v415, %v413
    %v446 = vpack.c.b16 %v416, %v414
    %v447 = vpack.c.b16 %v419, %v417
    %v448 = vpack.c.b16 %v420, %v418
    %v449 = vpack.c.b16 %v423, %v421
    %v450 = vpack.c.b16 %v424, %v422
    %v451 = vpack.c.b16 %v427, %v425
    %v452 = vpack.c.b16 %v428, %v426
    %v453 = vpack.c.b16 %v431, %v429
    %v454 = vpack.c.b16 %v432, %v430
    %v455 = vpack.c.b16 %v435, %v433
    %v456 = vpack.c.b16 %v436, %v434
    %v457 = vpack.c.b16 %v439, %v437
    %v458 = vpack.c.b16 %v440, %v438
    %v459 = vpack.c.b16 %v443, %v441
    %v460 = vpack.c.b16 %v444, %v442
    %477 = vmatpush.bf16.msra.mxu0 %v459
    %478 = vmatpush.bf16.msra.mxu0 %v457
    %479 = vmatpush.bf16.msra.mxu0 %v455
    %480 = vmatpush.bf16.msra.mxu0 %v453
    %481 = vmatpush.bf16.msra.mxu0 %v451
    %482 = vmatpush.bf16.msra.mxu0 %v449
    %483 = vmatpush.bf16.msra.mxu0 %v447
    %484 = vmatpush.bf16.msra.mxu0 %v445
    %485 = vmatmul.bf16.gmra.mxu0 %v251
    %v486 = vpop.f32.mrf.mxu0
    %v487 = vadd.f32 %v379, %v486
    %v488 = vpop.f32.mrf.mxu0
    %v489 = vadd.f32 %v381, %v488
    %490 = vdwg.mxu0
    %491 = vmatpush.bf16.msra.mxu0 %v460
    %492 = vmatpush.bf16.msra.mxu0 %v458
    %493 = vmatpush.bf16.msra.mxu0 %v456
    %494 = vmatpush.bf16.msra.mxu0 %v454
    %495 = vmatpush.bf16.msra.mxu0 %v452
    %496 = vmatpush.bf16.msra.mxu0 %v450
    %497 = vmatpush.bf16.msra.mxu0 %v448
    %498 = vmatpush.bf16.msra.mxu0 %v446
    %499 = vmatmul.bf16.gmra.mxu0 %v251
    %v500 = vpop.f32.mrf.mxu0
    %v501 = vadd.f32 %v393, %v500
    %v502 = vpop.f32.mrf.mxu0
    %v503 = vadd.f32 %v395, %v502
    %504 = vdwg.mxu0
    %v505 = vsel %vm249, 1, 0
    %v506 = vsel %vm250, 1, 0
    %v507 = vcvt.s32.f32 %v505
    %v508 = vcvt.s32.f32 %v506
    %v509 = vpack.c.bf16 %v508, %v507
    %v510 = vld [vmem:[#allocation7] sm:$0xff]
    %v511 = vld [vmem:[#allocation7 + $0x8] sm:$0xff]
    %v512 = vld [vmem:[#allocation7 + $0x10] sm:$0xff]
    %v513 = vld [vmem:[#allocation7 + $0x18] sm:$0xff]
    %v514 = vld [vmem:[#allocation7 + $0x20] sm:$0xff]
    %v515 = vld [vmem:[#allocation7 + $0x28] sm:$0xff]
    %v516 = vld [vmem:[#allocation7 + $0x30] sm:$0xff]
    %v517 = vld [vmem:[#allocation7 + $0x38] sm:$0xff]
    %v518 = vld [vmem:[#allocation7 + $0x40] sm:$0xff]
    %v519 = vld [vmem:[#allocation7 + $0x48] sm:$0xff]
    %v520 = vld [vmem:[#allocation7 + $0x50] sm:$0xff]
    %v521 = vld [vmem:[#allocation7 + $0x58] sm:$0xff]
    %v522 = vld [vmem:[#allocation7 + $0x60] sm:$0xff]
    %v523 = vld [vmem:[#allocation7 + $0x68] sm:$0xff]
    %v524 = vld [vmem:[#allocation7 + $0x70] sm:$0xff]
    %v525 = vld [vmem:[#allocation7 + $0x78] sm:$0xff]
    %v542 = vunpack.c.l.b16 %v510
    %v543 = vunpack.c.h.b16 %v510
    %v544 = vunpack.c.l.b16 %v511
    %v545 = vunpack.c.h.b16 %v511
    %v546 = vunpack.c.l.b16 %v512
    %v547 = vunpack.c.h.b16 %v512
    %v548 = vunpack.c.l.b16 %v513
    %v549 = vunpack.c.h.b16 %v513
    %v550 = vunpack.c.l.b16 %v514
    %v551 = vunpack.c.h.b16 %v514
    %v552 = vunpack.c.l.b16 %v515
    %v553 = vunpack.c.h.b16 %v515
    %v554 = vunpack.c.l.b16 %v516
    %v555 = vunpack.c.h.b16 %v516
    %v556 = vunpack.c.l.b16 %v517
    %v557 = vunpack.c.h.b16 %v517
    %v558 = vunpack.c.l.b16 %v518
    %v559 = vunpack.c.h.b16 %v518
    %v560 = vunpack.c.l.b16 %v519
    %v561 = vunpack.c.h.b16 %v519
    %v562 = vunpack.c.l.b16 %v520
    %v563 = vunpack.c.h.b16 %v520
    %v564 = vunpack.c.l.b16 %v521
    %v565 = vunpack.c.h.b16 %v521
    %v566 = vunpack.c.l.b16 %v522
    %v567 = vunpack.c.h.b16 %v522
    %v568 = vunpack.c.l.b16 %v523
    %v569 = vunpack.c.h.b16 %v523
    %v570 = vunpack.c.l.b16 %v524
    %v571 = vunpack.c.h.b16 %v524
    %v572 = vunpack.c.l.b16 %v525
    %v573 = vunpack.c.h.b16 %v525
    %v574 = vpack.c.b16 %v544, %v542
    %v575 = vpack.c.b16 %v545, %v543
    %v576 = vpack.c.b16 %v548, %v546
    %v577 = vpack.c.b16 %v549, %v547
    %v578 = vpack.c.b16 %v552, %v550
    %v579 = vpack.c.b16 %v553, %v551
    %v580 = vpack.c.b16 %v556, %v554
    %v581 = vpack.c.b16 %v557, %v555
    %v582 = vpack.c.b16 %v560, %v558
    %v583 = vpack.c.b16 %v561, %v559
    %v584 = vpack.c.b16 %v564, %v562
    %v585 = vpack.c.b16 %v565, %v563
    %v586 = vpack.c.b16 %v568, %v566
    %v587 = vpack.c.b16 %v569, %v567
    %v588 = vpack.c.b16 %v572, %v570
    %v589 = vpack.c.b16 %v573, %v571
    %606 = vmatpush.bf16.msra.mxu0 %v588
    %607 = vmatpush.bf16.msra.mxu0 %v586
    %608 = vmatpush.bf16.msra.mxu0 %v584
    %609 = vmatpush.bf16.msra.mxu0 %v582
    %610 = vmatpush.bf16.msra.mxu0 %v580
    %611 = vmatpush.bf16.msra.mxu0 %v578
    %612 = vmatpush.bf16.msra.mxu0 %v576
    %613 = vmatpush.bf16.msra.mxu0 %v574
    %614 = vmatmul.bf16.gmra.mxu0 %v509
    %v615 = vpop.f32.mrf.mxu0
    %v616 = vadd.f32 0.0, %v615
    %v617 = vpop.f32.mrf.mxu0
    %v618 = vadd.f32 0.0, %v617
    %619 = vdwg.mxu0
    %620 = vmatpush.bf16.msra.mxu0 %v589
    %621 = vmatpush.bf16.msra.mxu0 %v587
    %622 = vmatpush.bf16.msra.mxu0 %v585
    %623 = vmatpush.bf16.msra.mxu0 %v583
    %624 = vmatpush.bf16.msra.mxu0 %v581
    %625 = vmatpush.bf16.msra.mxu0 %v579
    %626 = vmatpush.bf16.msra.mxu0 %v577
    %627 = vmatpush.bf16.msra.mxu0 %v575
    %628 = vmatmul.bf16.gmra.mxu0 %v509
    %v629 = vpop.f32.mrf.mxu0
    %v630 = vadd.f32 0.0, %v629
    %v631 = vpop.f32.mrf.mxu0
    %v632 = vadd.f32 0.0, %v631
    %633 = vdwg.mxu0
    %v634 = vadd.f32 %v487, %v616
    %v635 = vadd.f32 %v501, %v630
    %v636 = vadd.f32 %v489, %v618
    %v637 = vadd.f32 %v503, %v632
    %v638 = vld [vmem:[%s3] sm:$0xff]
    %v639 = vld [vmem:[%s3 + $0x8] sm:$0xff]
    %v640 = vld [vmem:[%s7] sm:$0x1f]
    %v641 = vld [vmem:[%s7 + $0x8] sm:$0x1f]
    %643 = vset.pattern.permute.xlu0 0
    %644 = vperm.xlu0 %643, %v638
    %v645 = vpop.permute.xlu0 %644
    %648 = vset.pattern.permute.xlu0 0
    %649 = vperm.xlu0 %648, %v639
    %v650 = vpop.permute.xlu0 %649
    %v652 = vperm.slane %v640, 0
    %v653 = vperm.slane %v641, 0
    %v654 = vmul.f32 %v645, %v652
    %v655 = vmul.f32 %v645, %v653
    %v656 = vmul.f32 %v650, %v652
    %v657 = vmul.f32 %v650, %v653
    %v658 = vadd.f32 %v634, %v654
    %v659 = vadd.f32 %v635, %v655
    %v660 = vadd.f32 %v636, %v656
    %v661 = vadd.f32 %v637, %v657
    %662 = vset.pattern.permute.xlu0 1
    %663 = vperm.xlu0 %662, %v638
    %v664 = vpop.permute.xlu0 %663
    %666 = vset.pattern.permute.xlu0 1
    %667 = vperm.xlu0 %666, %v639
    %v668 = vpop.permute.xlu0 %667
    %v670 = vperm.slane %v640, 1
    %v671 = vperm.slane %v641, 1
    %v672 = vmul.f32 %v664, %v670
    %v673 = vmul.f32 %v664, %v671
    %v674 = vmul.f32 %v668, %v670
    %v675 = vmul.f32 %v668, %v671
    %v676 = vadd.f32 %v658, %v672
    %v677 = vadd.f32 %v659, %v673
    %v678 = vadd.f32 %v660, %v674
    %v679 = vadd.f32 %v661, %v675
    %680 = vset.pattern.permute.xlu0 2
    %681 = vperm.xlu0 %680, %v638
    %v682 = vpop.permute.xlu0 %681
    %684 = vset.pattern.permute.xlu0 2
    %685 = vperm.xlu0 %684, %v639
    %v686 = vpop.permute.xlu0 %685
    %v688 = vperm.slane %v640, 2
    %v689 = vperm.slane %v641, 2
    %v690 = vmul.f32 %v682, %v688
    %v691 = vmul.f32 %v682, %v689
    %v692 = vmul.f32 %v686, %v688
    %v693 = vmul.f32 %v686, %v689
    %v694 = vadd.f32 %v676, %v690
    %v695 = vadd.f32 %v677, %v691
    %v696 = vadd.f32 %v678, %v692
    %v697 = vadd.f32 %v679, %v693
    %698 = vset.pattern.permute.xlu0 3
    %699 = vperm.xlu0 %698, %v638
    %v700 = vpop.permute.xlu0 %699
    %702 = vset.pattern.permute.xlu0 3
    %703 = vperm.xlu0 %702, %v639
    %v704 = vpop.permute.xlu0 %703
    %v706 = vperm.slane %v640, 3
    %v707 = vperm.slane %v641, 3
    %v708 = vmul.f32 %v700, %v706
    %v709 = vmul.f32 %v700, %v707
    %v710 = vmul.f32 %v704, %v706
    %v711 = vmul.f32 %v704, %v707
    %v712 = vadd.f32 %v694, %v708
    %v713 = vadd.f32 %v695, %v709
    %v714 = vadd.f32 %v696, %v710
    %v715 = vadd.f32 %v697, %v711
    %716 = vset.pattern.permute.xlu0 4
    %717 = vperm.xlu0 %716, %v638
    %v718 = vpop.permute.xlu0 %717
    %720 = vset.pattern.permute.xlu0 4
    %721 = vperm.xlu0 %720, %v639
    %v722 = vpop.permute.xlu0 %721
    %v724 = vperm.slane %v640, 4
    %v725 = vperm.slane %v641, 4
    %v726 = vmul.f32 %v718, %v724
    %v727 = vmul.f32 %v718, %v725
    %v728 = vmul.f32 %v722, %v724
    %v729 = vmul.f32 %v722, %v725
    %v730 = vadd.f32 %v712, %v726
    %v731 = vadd.f32 %v713, %v727
    %v732 = vadd.f32 %v714, %v728
    %v733 = vadd.f32 %v715, %v729
    %v734 = vld [vmem:[%s8] sm:$0x3]
    %v736 = vperm.slane %v734, 0
    %v737 = vperm.slane %v734, 1
    %v740 = vadd.f32 %v730, %v736
    %v741 = vadd.f32 %v731, %v737
    %v742 = vadd.f32 %v732, %v736
    %v743 = vadd.f32 %v733, %v737
    %v744 = vmax.f32 %v740, 0.0
    %v745 = vmax.f32 %v741, 0.0
    %v746 = vmax.f32 %v742, 0.0
    %v747 = vmax.f32 %v743, 0.0
    %v748 = vpack.c.bf16 %v746, %v744
    %v749 = vpack.c.bf16 %v747, %v745
    %v750 = vld [vmem:[#allocation8] sm:$0xf]
    %v751 = vld [vmem:[#allocation8 + $0x4] sm:$0xf]
    %v752 = vld [vmem:[#allocation8 + $0x8] sm:$0xf]
    %v753 = vld [vmem:[#allocation8 + $0xc] sm:$0xf]
    %v754 = vld [vmem:[#allocation8 + $0x10] sm:$0xf]
    %v755 = vld [vmem:[#allocation8 + $0x14] sm:$0xf]
    %v756 = vld [vmem:[#allocation8 + $0x18] sm:$0xf]
    %v757 = vld [vmem:[#allocation8 + $0x1c] sm:$0xf]
    %v758 = vld [vmem:[#allocation8 + $0x20] sm:$0xf]
    %v759 = vld [vmem:[#allocation8 + $0x24] sm:$0xf]
    %v760 = vld [vmem:[#allocation8 + $0x28] sm:$0xf]
    %v761 = vld [vmem:[#allocation8 + $0x2c] sm:$0xf]
    %v762 = vld [vmem:[#allocation8 + $0x30] sm:$0xf]
    %v763 = vld [vmem:[#allocation8 + $0x34] sm:$0xf]
    %v764 = vld [vmem:[#allocation8 + $0x38] sm:$0xf]
    %v765 = vld [vmem:[#allocation8 + $0x3c] sm:$0xf]
    %v766 = vld [vmem:[#allocation8 + $0x40] sm:$0xf]
    %v767 = vld [vmem:[#allocation8 + $0x44] sm:$0xf]
    %v768 = vld [vmem:[#allocation8 + $0x48] sm:$0xf]
    %v769 = vld [vmem:[#allocation8 + $0x4c] sm:$0xf]
    %v770 = vld [vmem:[#allocation8 + $0x50] sm:$0xf]
    %v771 = vld [vmem:[#allocation8 + $0x54] sm:$0xf]
    %v772 = vld [vmem:[#allocation8 + $0x58] sm:$0xf]
    %v773 = vld [vmem:[#allocation8 + $0x5c] sm:$0xf]
    %v774 = vld [vmem:[#allocation8 + $0x60] sm:$0xf]
    %v775 = vld [vmem:[#allocation8 + $0x64] sm:$0xf]
    %v776 = vld [vmem:[#allocation8 + $0x68] sm:$0xf]
    %v777 = vld [vmem:[#allocation8 + $0x6c] sm:$0xf]
    %v778 = vld [vmem:[#allocation8 + $0x70] sm:$0xf]
    %v779 = vld [vmem:[#allocation8 + $0x74] sm:$0xf]
    %v780 = vld [vmem:[#allocation8 + $0x78] sm:$0xf]
    %v781 = vld [vmem:[#allocation8 + $0x7c] sm:$0xf]
    %v782 = vld [vmem:[%s10] sm:$0x1]
    %v784 = vperm.slane %v782, 0
    %v818 = vunpack.c.l.b16 %v750
    %v819 = vunpack.c.l.b16 %v751
    %v820 = vunpack.c.l.b16 %v752
    %v821 = vunpack.c.l.b16 %v753
    %v822 = vunpack.c.l.b16 %v754
    %v823 = vunpack.c.l.b16 %v755
    %v824 = vunpack.c.l.b16 %v756
    %v825 = vunpack.c.l.b16 %v757
    %v826 = vunpack.c.l.b16 %v758
    %v827 = vunpack.c.l.b16 %v759
    %v828 = vunpack.c.l.b16 %v760
    %v829 = vunpack.c.l.b16 %v761
    %v830 = vunpack.c.l.b16 %v762
    %v831 = vunpack.c.l.b16 %v763
    %v832 = vunpack.c.l.b16 %v764
    %v833 = vunpack.c.l.b16 %v765
    %v834 = vunpack.c.l.b16 %v766
    %v835 = vunpack.c.l.b16 %v767
    %v836 = vunpack.c.l.b16 %v768
    %v837 = vunpack.c.l.b16 %v769
    %v838 = vunpack.c.l.b16 %v770
    %v839 = vunpack.c.l.b16 %v771
    %v840 = vunpack.c.l.b16 %v772
    %v841 = vunpack.c.l.b16 %v773
    %v842 = vunpack.c.l.b16 %v774
    %v843 = vunpack.c.l.b16 %v775
    %v844 = vunpack.c.l.b16 %v776
    %v845 = vunpack.c.l.b16 %v777
    %v846 = vunpack.c.l.b16 %v778
    %v847 = vunpack.c.l.b16 %v779
    %v848 = vunpack.c.l.b16 %v780
    %v849 = vunpack.c.l.b16 %v781
    %v850 = vpack.c.b16 %v819, %v818
    %v851 = vpack.c.b16 %v821, %v820
    %v852 = vpack.c.b16 %v823, %v822
    %v853 = vpack.c.b16 %v825, %v824
    %v854 = vpack.c.b16 %v827, %v826
    %v855 = vpack.c.b16 %v829, %v828
    %v856 = vpack.c.b16 %v831, %v830
    %v857 = vpack.c.b16 %v833, %v832
    %v858 = vpack.c.b16 %v835, %v834
    %v859 = vpack.c.b16 %v837, %v836
    %v860 = vpack.c.b16 %v839, %v838
    %v861 = vpack.c.b16 %v841, %v840
    %v862 = vpack.c.b16 %v843, %v842
    %v863 = vpack.c.b16 %v845, %v844
    %v864 = vpack.c.b16 %v847, %v846
    %v865 = vpack.c.b16 %v849, %v848
    %882 = vmatpush.bf16.msra.mxu0 %v857
    %883 = vmatpush.bf16.msra.mxu0 %v856
    %884 = vmatpush.bf16.msra.mxu0 %v855
    %885 = vmatpush.bf16.msra.mxu0 %v854
    %886 = vmatpush.bf16.msra.mxu0 %v853
    %887 = vmatpush.bf16.msra.mxu0 %v852
    %888 = vmatpush.bf16.msra.mxu0 %v851
    %889 = vmatpush.bf16.msra.mxu0 %v850
    %890 = vmatmul.bf16.gmra.mxu0 %v748
    %v891 = vpop.f32.mrf.mxu0
    %v892 = vadd.f32 %v784, %v891
    %v893 = vpop.f32.mrf.mxu0
    %v894 = vadd.f32 %v784, %v893
    %895 = vdwg.mxu0
    %896 = vmatpush.bf16.msra.mxu0 %v865
    %897 = vmatpush.bf16.msra.mxu0 %v864
    %898 = vmatpush.bf16.msra.mxu0 %v863
    %899 = vmatpush.bf16.msra.mxu0 %v862
    %900 = vmatpush.bf16.msra.mxu0 %v861
    %901 = vmatpush.bf16.msra.mxu0 %v860
    %902 = vmatpush.bf16.msra.mxu0 %v859
    %903 = vmatpush.bf16.msra.mxu0 %v858
    %904 = vmatmul.bf16.gmra.mxu0 %v749
    %v905 = vpop.f32.mrf.mxu0
    %v906 = vadd.f32 %v892, %v905
    %v907 = vpop.f32.mrf.mxu0
    %v908 = vadd.f32 %v894, %v907
    %909 = vdwg.mxu0
    %v910 = vmax.f32 %v906, 0.0
    %v911 = vmax.f32 %v908, 0.0
    %v912 = vpack.c.bf16 %v911, %v910
    %v913 = vld [vmem:[%s11] sm:$0xf]
    %v914 = vld [vmem:[%s11 + $0x4] sm:$0xf]
    %v915 = vld [vmem:[%s11 + $0x8] sm:$0xf]
    %v916 = vld [vmem:[%s11 + $0xc] sm:$0xf]
    %v917 = vld [vmem:[%s11 + $0x10] sm:$0xf]
    %v918 = vld [vmem:[%s11 + $0x14] sm:$0xf]
    %v919 = vld [vmem:[%s11 + $0x18] sm:$0xf]
    %v920 = vld [vmem:[%s11 + $0x1c] sm:$0xf]
    %v921 = vld [vmem:[%s11 + $0x20] sm:$0xf]
    %v922 = vld [vmem:[%s11 + $0x24] sm:$0xf]
    %v923 = vld [vmem:[%s11 + $0x28] sm:$0xf]
    %v924 = vld [vmem:[%s11 + $0x2c] sm:$0xf]
    %v925 = vld [vmem:[%s11 + $0x30] sm:$0xf]
    %v926 = vld [vmem:[%s11 + $0x34] sm:$0xf]
    %v927 = vld [vmem:[%s11 + $0x38] sm:$0xf]
    %v928 = vld [vmem:[%s11 + $0x3c] sm:$0xf]
    %v929 = vld [vmem:[%s12] sm:$0x1]
    %v931 = vperm.slane %v929, 0
    %v949 = vunpack.c.l.b16 %v913
    %v950 = vunpack.c.l.b16 %v914
    %v951 = vunpack.c.l.b16 %v915
    %v952 = vunpack.c.l.b16 %v916
    %v953 = vunpack.c.l.b16 %v917
    %v954 = vunpack.c.l.b16 %v918
    %v955 = vunpack.c.l.b16 %v919
    %v956 = vunpack.c.l.b16 %v920
    %v957 = vunpack.c.l.b16 %v921
    %v958 = vunpack.c.l.b16 %v922
    %v959 = vunpack.c.l.b16 %v923
    %v960 = vunpack.c.l.b16 %v924
    %v961 = vunpack.c.l.b16 %v925
    %v962 = vunpack.c.l.b16 %v926
    %v963 = vunpack.c.l.b16 %v927
    %v964 = vunpack.c.l.b16 %v928
    %v965 = vpack.c.b16 %v950, %v949
    %v966 = vpack.c.b16 %v952, %v951
    %v967 = vpack.c.b16 %v954, %v953
    %v968 = vpack.c.b16 %v956, %v955
    %v969 = vpack.c.b16 %v958, %v957
    %v970 = vpack.c.b16 %v960, %v959
    %v971 = vpack.c.b16 %v962, %v961
    %v972 = vpack.c.b16 %v964, %v963
    %981 = vmatpush.bf16.msra.mxu0 %v972
    %982 = vmatpush.bf16.msra.mxu0 %v971
    %983 = vmatpush.bf16.msra.mxu0 %v970
    %984 = vmatpush.bf16.msra.mxu0 %v969
    %985 = vmatpush.bf16.msra.mxu0 %v968
    %986 = vmatpush.bf16.msra.mxu0 %v967
    %987 = vmatpush.bf16.msra.mxu0 %v966
    %988 = vmatpush.bf16.msra.mxu0 %v965
    %989 = vmatmul.bf16.gmra.mxu0 %v912
    %v990 = vpop.f32.mrf.mxu0
    %v991 = vadd.f32 %v931, %v990
    %v992 = vpop.f32.mrf.mxu0
    %v993 = vadd.f32 %v931, %v992
    %994 = vdwg.mxu0
    %v995 = vmax.f32 %v991, 0.0
    %v996 = vmax.f32 %v993, 0.0
    %v997 = vld [vmem:[%s13] sm:$0x1]
    %v999 = vperm.slane %v997, 0
    %v1001 = vmul.f32 %v995, %v999
    %v1002 = vmul.f32 %v996, %v999
    %vm1003 = vcmask 523264
    %v1004 = vsel %vm1003, %v1001, 0.0
    %1005 = vadd.xlane.f32.xlu0 %v1004
    %v1006 = vpop.xlane.xlu0 %1005
    %v1007 = vsel %vm1003, %v1002, 0.0
    %1008 = vadd.xlane.f32.xlu0 %v1007
    %v1009 = vpop.xlane.xlu0 %1008
    %v1010 = vld [vmem:[#allocation2] sm:$0x1]
    %v1012 = vperm.slane %v1010, 0
    %v1014 = vadd.f32 %v1006, %v1012
    %v1015 = vadd.f32 %v1009, %v1012
    %vm1016 = vcmask 7168
    %1017 = vst.msk [vmem:[%s15] sm:$0xff] %vm1016, %v1014
    %1018 = vst.msk [vmem:[%s15 + $0x8] sm:$0xff] %vm1016, %v1015
    // Predicated region
    $region78: #{tpu_custom_call.1} parent=1 // pred_check
      _
    $region79: #{tpu_custom_call.1} parent=1 // pred_check_branch
      %1020 = sbr.rel (0) target = $region81
    $region80: #{tpu_custom_call.1} parent=1 // pred_region
      _
    $region81: #{tpu_custom_call.1} parent=1 // pred_fallthru
      _
    // Predicated region
    $region82: #{tpu_custom_call.1} parent=1 // pred_check
      _
    $region83: #{tpu_custom_call.1} parent=1 // pred_check_branch
      %1022 = sbr.rel (0) target = $region85
    $region84: #{tpu_custom_call.1} parent=1 // pred_region
      _
    $region85: #{tpu_custom_call.1} parent=1 // pred_fallthru
      _
    %1023 = vsyncpa [#allocation4], 1
    %1024 = vsyncpa [#allocation6], 1
    %1025 = vsyncpa [#allocation9], 1

</llo_original>
